<compile_context>
chip_gen: v5e
topology: v5e:2x2
jax: 0.10.0
libtpu: 0.0.40
codegen_flags: <defaults>
</compile_context>

<pallas_src>
import jax
import jax.numpy as jnp
from jax import lax
from jax.experimental import pallas as pl
from jax.experimental.pallas import tpu as pltpu


def _round_up(x, m):
    return (x + m - 1) // m * m


# --------------------------------------------------------------------------
# Kernel
# --------------------------------------------------------------------------
def _make_network_kernel(num_hidden, G, O):
    """num_hidden = number of (Linear, ReLU) trunk layers.

    Ref order (variadic):
        x_ref, w_0, b_0, w_1, b_1, ..., w_{L-1}, b_{L-1}, out_ref
    where L = num_hidden + 1 (arti) + 1 (fused MDN head).
        stages [0 .. num_hidden-1]  trunk linears (ReLU after each)
        stage  [num_hidden]         linear_for_arti (no activation)
        stage  [num_hidden + 1]     fused MDN head: [ pi | sigma | mu | pad ]
    Weights are bf16, biases f32, activations are cast to bf16 before each
    matmul; accumulation and epilogue math are f32.
    """
    GO = G * O

    def kernel(*refs):
        x_ref = refs[0]
        out_ref = refs[-1]
        w_refs = refs[1:-1:2]
        b_refs = refs[2:-1:2]

        h = x_ref[...]  # [TB, K0_pad] bf16

        # DNN trunk: Linear + ReLU (f32 accumulate, bf16 for the next matmul)
        for l in range(num_hidden):
            y = jnp.dot(h, w_refs[l][...],
                        preferred_element_type=jnp.float32) + b_refs[l][...]
            h = jnp.maximum(y, 0.0).astype(jnp.bfloat16)

        # linear_for_arti (no activation)
        arti = (jnp.dot(h, w_refs[num_hidden][...],
                        preferred_element_type=jnp.float32)
                + b_refs[num_hidden][...]).astype(jnp.bfloat16)

        # Fused MDN head: a single matmul produces [pi | sigma | mu | pad]
        head = jnp.dot(arti, w_refs[num_hidden + 1][...],
                       preferred_element_type=jnp.float32) \
            + b_refs[num_hidden + 1][...]

        col = lax.broadcasted_iota(jnp.int32, head.shape, 1)
        is_pi = col < G
        is_sigma = (col >= G) & (col < G + GO)

        # pi: softmax over the G gaussian columns (torch Softmax(dim=1)),
        # exact normalization.
        masked = jnp.where(is_pi, head, -jnp.inf)
        m = jnp.max(masked, axis=-1, keepdims=True)
        e = jnp.exp(masked - m)                       # exp(-inf) == 0 on mask
        denom = jnp.sum(e, axis=-1, keepdims=True)
        pi = e / denom

        # sigma: exp(Linear);  mu: Linear (identity). Select per lane range,
        # store one lane-dense f32 slab.
        sig = jnp.exp(head)
        out_ref[...] = jnp.where(is_pi, pi, jnp.where(is_sigma, sig, head))

    return kernel


# --------------------------------------------------------------------------
# Parameter init (matches PyTorch nn.Linear default init) + packing
# --------------------------------------------------------------------------
def _linear_params(key, n_in, n_out):
    kw, kb = jax.random.split(key)
    bound = 1.0 / jnp.sqrt(jnp.float32(n_in))
    w = jax.random.uniform(kw, (n_in, n_out), jnp.float32, -bound, bound)
    b = jax.random.uniform(kb, (1, n_out), jnp.float32, -bound, bound)
    return w, b


def init_network_params(key, layer_sizes_no_out, out_arti_size, mdn_gaussian_num):
    params = {"dnn": []}
    n_layers = len(layer_sizes_no_out) - 1
    keys = jax.random.split(key, n_layers + 4)
    for l in range(n_layers):
        params["dnn"].append(
            _linear_params(keys[l], layer_sizes_no_out[l], layer_sizes_no_out[l + 1])
        )
    params["arti"] = _linear_params(keys[n_layers], layer_sizes_no_out[-1], out_arti_size)
    params["pi"] = _linear_params(keys[n_layers + 1], out_arti_size, mdn_gaussian_num)
    params["sigma"] = _linear_params(
        keys[n_layers + 2], out_arti_size, mdn_gaussian_num * out_arti_size
    )
    params["mu"] = _linear_params(
        keys[n_layers + 3], out_arti_size, mdn_gaussian_num * out_arti_size
    )
    return params


def _pack_stage(w, b, w_dtype=jnp.bfloat16):
    """Tightly zero-pad one Linear stage to (round_up(K,128), round_up(N,128))."""
    K, N = w.shape
    Kp, Np = _round_up(K, 128), _round_up(N, 128)
    wp = jnp.zeros((Kp, Np), w_dtype).at[:K, :N].set(w.astype(w_dtype))
    bp = jnp.zeros((1, Np), jnp.float32).at[:, :N].set(b[0].astype(jnp.float32))
    return wp, bp


def _pack_params(params):
    """Return list of (weight_bf16 [Kp,Np], bias_f32 [1,Np]) per stage.

    Stage order: trunk linears, arti linear, fused MDN head (pi|sigma|mu).
    Consecutive padded widths chain (N_{l-1}_pad == K_l_pad), so no slicing
    is needed inside the kernel and zero padding stays inert (ReLU(0)=0,
    zero weight rows/cols).
    """
    stages = list(params["dnn"]) + [params["arti"]]
    w_pi, b_pi = params["pi"]
    w_sg, b_sg = params["sigma"]
    w_mu, b_mu = params["mu"]
    stages.append((jnp.concatenate([w_pi, w_sg, w_mu], axis=1),
                   jnp.concatenate([b_pi, b_sg, b_mu], axis=1)))
    return [_pack_stage(w, b) for w, b in stages]


# --------------------------------------------------------------------------
# Forward pass wrapper
# --------------------------------------------------------------------------
def network_forward(x, params, layer_sizes_no_out, out_arti_size, mdn_gaussian_num,
                    *, batch_tile=512):
    B_in, in_dim = x.shape
    G, O = mdn_gaussian_num, out_arti_size
    head_w = G + 2 * G * O
    num_hidden = len(layer_sizes_no_out) - 1
    L = num_hidden + 2

    packed = _pack_params(params)          # [(w_bf16, b_f32)] * L, tight pads
    K0p = packed[0][0].shape[0]            # round_up(in_dim, 128)
    Nhp = packed[-1][0].shape[1]           # round_up(head_w, 128)

    # Batch tiling: big tiles to amortize per-step overhead, >=2 grid steps
    # when the batch allows so both v7x TensorCores get work.
    TB = max(8, _round_up(min(batch_tile, _round_up(B_in, 8)), 8))
    B_pad = _round_up(B_in, TB)
    if B_pad // TB < 2 and B_pad >= 16:
        TB = _round_up(-(-B_pad // 2), 8)
        B_pad = _round_up(B_in, TB)

    x_pad = jnp.zeros((B_pad, K0p), jnp.bfloat16).at[:B_in, :in_dim].set(
        x.astype(jnp.bfloat16))

    # VMEM budget: double-buffered activation/output tiles + resident params.
    param_bytes = sum(w.size * w.dtype.itemsize + b.size * b.dtype.itemsize
                      for w, b in packed)
    tile_bytes = 2 * (TB * K0p * 2) + 2 * (TB * Nhp * 4)
    vmem_limit = max(32 << 20, min(2 * (param_bytes + tile_bytes) + (4 << 20),
                                   64 << 20))

    kernel = _make_network_kernel(num_hidden, G, O)

    # in_specs: activations tiled over the batch axis; each stage's weight &
    # bias uses a constant index_map -> DMA'd once, VMEM-resident.
    in_specs = [pl.BlockSpec((TB, K0p), lambda i: (i, 0))]
    flat_inputs = [x_pad]
    for w, b in packed:
        in_specs.append(pl.BlockSpec(w.shape, lambda i: (0, 0)))
        in_specs.append(pl.BlockSpec(b.shape, lambda i: (0, 0)))
        flat_inputs.append(w)
        flat_inputs.append(b)

    out = pl.pallas_call(
        kernel,
        out_shape=jax.ShapeDtypeStruct((B_pad, Nhp), jnp.float32),
        grid_spec=pltpu.PrefetchScalarGridSpec(
            num_scalar_prefetch=0,
            grid=(B_pad // TB,),
            in_specs=in_specs,
            out_specs=pl.BlockSpec((TB, Nhp), lambda i: (i, 0)),  # lane-dense
        ),
        compiler_params=pltpu.CompilerParams(
            dimension_semantics=("parallel",),          # megacore / v7x 2 TCs
            vmem_limit_bytes=int(vmem_limit),
        ),
    )(*flat_inputs)

    # Glue: split the fused slab and reshape like mdn.MDN / torch .view.
    pi = out[:B_in, :G]
    sigma = out[:B_in, G:G + G * O].reshape(B_in, G, O)
    mu = out[:B_in, G + G * O:G + 2 * G * O].reshape(B_in, G, O)
    return pi, sigma, mu


# Pure-JAX f32 reference (mirrors the PyTorch module) for a correctness check.
def network_forward_ref(x, params, out_arti_size, mdn_gaussian_num):
    B = x.shape[0]
    h = x
    for w, b in params["dnn"]:
        h = jnp.maximum(h @ w + b, 0.0)
    arti = h @ params["arti"][0] + params["arti"][1]
    pi = jax.nn.softmax(arti @ params["pi"][0] + params["pi"][1], axis=1)
    sigma = jnp.exp(arti @ params["sigma"][0] + params["sigma"][1]).reshape(
        B, mdn_gaussian_num, out_arti_size)
    mu = (arti @ params["mu"][0] + params["mu"][1]).reshape(
        B, mdn_gaussian_num, out_arti_size)
    return pi, sigma, mu


if __name__ == "__main__":
    # Small, module-consistent configuration.
    layer_sizes_no_out = [16, 32, 32]   # input dim 16, two Linear+ReLU layers
    out_arti_size = 8
    mdn_gaussian_num = 2
    batch = 4

    key = jax.random.PRNGKey(0)
    k_params, k_x = jax.random.split(key)

    params = init_network_params(
        k_params, layer_sizes_no_out, out_arti_size, mdn_gaussian_num)
    x = jax.random.normal(k_x, (batch, layer_sizes_no_out[0]), jnp.float32)

    pi, sigma, mu = network_forward(
        x, params, layer_sizes_no_out, out_arti_size, mdn_gaussian_num)
    jax.block_until_ready((pi, sigma, mu))

    assert pi.shape == (batch, mdn_gaussian_num)
    assert sigma.shape == (batch, mdn_gaussian_num, out_arti_size)
    assert mu.shape == (batch, mdn_gaussian_num, out_arti_size)

    # Correctness check against the plain-JAX f32 reference. The kernel uses
    # bf16 matmul operands (f32 accumulation), so allow bf16-level tolerance.
    pi_r, sigma_r, mu_r = network_forward_ref(
        x, params, out_arti_size, mdn_gaussian_num)
    assert jnp.allclose(pi, pi_r, rtol=8e-2, atol=3e-2)
    assert jnp.allclose(sigma, sigma_r, rtol=8e-2, atol=3e-2)
    assert jnp.allclose(mu, mu_r, rtol=8e-2, atol=3e-2)
    # Mixture weights must normalize exactly (no approx reciprocal anymore).
    assert jnp.allclose(jnp.sum(pi, axis=1), 1.0, atol=1e-5)

    print("KERNEL_OK")
</pallas_src>

<mosaic_0001>
module attributes {stable_mosaic.version = 11 : i64} {
  func.func @kernel(%arg0: i32, %arg1: memref<8x128xbf16, #tpu.memory_space<vmem>>, %arg2: memref<128x128xbf16, #tpu.memory_space<vmem>>, %arg3: memref<1x128xf32, #tpu.memory_space<vmem>>, %arg4: memref<128x128xbf16, #tpu.memory_space<vmem>>, %arg5: memref<1x128xf32, #tpu.memory_space<vmem>>, %arg6: memref<128x128xbf16, #tpu.memory_space<vmem>>, %arg7: memref<1x128xf32, #tpu.memory_space<vmem>>, %arg8: memref<128x128xbf16, #tpu.memory_space<vmem>>, %arg9: memref<1x128xf32, #tpu.memory_space<vmem>>, %arg10: memref<8x128xf32, #tpu.memory_space<vmem>>) attributes {dimension_semantics = [#tpu.dimension_semantics<parallel>], iteration_bounds = array<i64: 1>, scalar_prefetch = 0 : i64, scratch_operands = 0 : i64, tpu.core_type = #tpu.core_type<tc>, window_params = [{transform_indices = @transform_0, window_bounds = array<i64: 8, 128>}, {pipeline_mode = #tpu.pipeline_mode<synchronous>, transform_indices = @transform_1, window_bounds = array<i64: 128, 128>}, {pipeline_mode = #tpu.pipeline_mode<synchronous>, transform_indices = @transform_2, window_bounds = array<i64: 1, 128>}, {pipeline_mode = #tpu.pipeline_mode<synchronous>, transform_indices = @transform_3, window_bounds = array<i64: 128, 128>}, {pipeline_mode = #tpu.pipeline_mode<synchronous>, transform_indices = @transform_4, window_bounds = array<i64: 1, 128>}, {pipeline_mode = #tpu.pipeline_mode<synchronous>, transform_indices = @transform_5, window_bounds = array<i64: 128, 128>}, {pipeline_mode = #tpu.pipeline_mode<synchronous>, transform_indices = @transform_6, window_bounds = array<i64: 1, 128>}, {pipeline_mode = #tpu.pipeline_mode<synchronous>, transform_indices = @transform_7, window_bounds = array<i64: 128, 128>}, {pipeline_mode = #tpu.pipeline_mode<synchronous>, transform_indices = @transform_8, window_bounds = array<i64: 1, 128>}, {transform_indices = @transform_9, window_bounds = array<i64: 8, 128>}]} {
    %c0 = arith.constant 0 : index
    %c0_0 = arith.constant 0 : index
    %0 = vector.load %arg1[%c0, %c0_0] : memref<8x128xbf16, #tpu.memory_space<vmem>>, vector<8x128xbf16>
    %c0_1 = arith.constant 0 : index
    %c0_2 = arith.constant 0 : index
    %1 = vector.load %arg2[%c0_1, %c0_2] : memref<128x128xbf16, #tpu.memory_space<vmem>>, vector<128x128xbf16>
    %cst = arith.constant dense<0.000000e+00> : vector<8x128xf32>
    %2 = tpu.matmul %0, %1, %cst {dimension_numbers = #tpu.dot_dimension_numbers<[1], [0], [0], [1], [0, 0, 1, 1], [], []>} : vector<8x128xbf16>, vector<128x128xbf16>, vector<8x128xf32> -> vector<8x128xf32>
    %c0_3 = arith.constant 0 : index
    %c0_4 = arith.constant 0 : index
    %3 = vector.load %arg3[%c0_3, %c0_4] : memref<1x128xf32, #tpu.memory_space<vmem>>, vector<1x128xf32>
    %4 = vector.broadcast %3 : vector<1x128xf32> to vector<8x128xf32>
    %5 = arith.addf %2, %4 : vector<8x128xf32>
    %cst_5 = arith.constant 0.000000e+00 : f32
    %6 = vector.broadcast %cst_5 : f32 to vector<8x128xf32>
    %7 = arith.maximumf %5, %6 : vector<8x128xf32>
    %8 = arith.truncf %7 : vector<8x128xf32> to vector<8x128xbf16>
    %c0_6 = arith.constant 0 : index
    %c0_7 = arith.constant 0 : index
    %9 = vector.load %arg4[%c0_6, %c0_7] : memref<128x128xbf16, #tpu.memory_space<vmem>>, vector<128x128xbf16>
    %cst_8 = arith.constant dense<0.000000e+00> : vector<8x128xf32>
    %10 = tpu.matmul %8, %9, %cst_8 {dimension_numbers = #tpu.dot_dimension_numbers<[1], [0], [0], [1], [0, 0, 1, 1], [], []>} : vector<8x128xbf16>, vector<128x128xbf16>, vector<8x128xf32> -> vector<8x128xf32>
    %c0_9 = arith.constant 0 : index
    %c0_10 = arith.constant 0 : index
    %11 = vector.load %arg5[%c0_9, %c0_10] : memref<1x128xf32, #tpu.memory_space<vmem>>, vector<1x128xf32>
    %12 = vector.broadcast %11 : vector<1x128xf32> to vector<8x128xf32>
    %13 = arith.addf %10, %12 : vector<8x128xf32>
    %cst_11 = arith.constant 0.000000e+00 : f32
    %14 = vector.broadcast %cst_11 : f32 to vector<8x128xf32>
    %15 = arith.maximumf %13, %14 : vector<8x128xf32>
    %16 = arith.truncf %15 : vector<8x128xf32> to vector<8x128xbf16>
    %c0_12 = arith.constant 0 : index
    %c0_13 = arith.constant 0 : index
    %17 = vector.load %arg6[%c0_12, %c0_13] : memref<128x128xbf16, #tpu.memory_space<vmem>>, vector<128x128xbf16>
    %cst_14 = arith.constant dense<0.000000e+00> : vector<8x128xf32>
    %18 = tpu.matmul %16, %17, %cst_14 {dimension_numbers = #tpu.dot_dimension_numbers<[1], [0], [0], [1], [0, 0, 1, 1], [], []>} : vector<8x128xbf16>, vector<128x128xbf16>, vector<8x128xf32> -> vector<8x128xf32>
    %c0_15 = arith.constant 0 : index
    %c0_16 = arith.constant 0 : index
    %19 = vector.load %arg7[%c0_15, %c0_16] : memref<1x128xf32, #tpu.memory_space<vmem>>, vector<1x128xf32>
    %20 = vector.broadcast %19 : vector<1x128xf32> to vector<8x128xf32>
    %21 = arith.addf %18, %20 : vector<8x128xf32>
    %22 = arith.truncf %21 : vector<8x128xf32> to vector<8x128xbf16>
    %c0_17 = arith.constant 0 : index
    %c0_18 = arith.constant 0 : index
    %23 = vector.load %arg8[%c0_17, %c0_18] : memref<128x128xbf16, #tpu.memory_space<vmem>>, vector<128x128xbf16>
    %cst_19 = arith.constant dense<0.000000e+00> : vector<8x128xf32>
    %24 = tpu.matmul %22, %23, %cst_19 {dimension_numbers = #tpu.dot_dimension_numbers<[1], [0], [0], [1], [0, 0, 1, 1], [], []>} : vector<8x128xbf16>, vector<128x128xbf16>, vector<8x128xf32> -> vector<8x128xf32>
    %c0_20 = arith.constant 0 : index
    %c0_21 = arith.constant 0 : index
    %25 = vector.load %arg9[%c0_20, %c0_21] : memref<1x128xf32, #tpu.memory_space<vmem>>, vector<1x128xf32>
    %26 = vector.broadcast %25 : vector<1x128xf32> to vector<8x128xf32>
    %27 = arith.addf %24, %26 : vector<8x128xf32>
    %28 = tpu.iota {dimensions = array<i32: 1>} : vector<8x128xi32>
    %c2_i32 = arith.constant 2 : i32
    %29 = vector.broadcast %c2_i32 : i32 to vector<8x128xi32>
    %30 = arith.cmpi slt, %28, %29 : vector<8x128xi32>
    %c2_i32_22 = arith.constant 2 : i32
    %31 = vector.broadcast %c2_i32_22 : i32 to vector<8x128xi32>
    %32 = arith.cmpi sge, %28, %31 : vector<8x128xi32>
    %c18_i32 = arith.constant 18 : i32
    %33 = vector.broadcast %c18_i32 : i32 to vector<8x128xi32>
    %34 = arith.cmpi slt, %28, %33 : vector<8x128xi32>
    %35 = arith.andi %32, %34 : vector<8x128xi1>
    %cst_23 = arith.constant 0xFF800000 : f32
    %36 = vector.broadcast %cst_23 : f32 to vector<8x128xf32>
    %37 = arith.select %30, %27, %36 : vector<8x128xi1>, vector<8x128xf32>
    %cst_24 = arith.constant dense<0xFF800000> : vector<8xf32>
    %38 = vector.multi_reduction <maximumf>, %37, %cst_24 [1] : vector<8x128xf32> to vector<8xf32>
    %39 = vector.shape_cast %38 : vector<8xf32> to vector<8x1xf32>
    %40 = vector.broadcast %39 : vector<8x1xf32> to vector<8x128xf32>
    %41 = arith.subf %37, %40 : vector<8x128xf32>
    %42 = math.exp %41 : vector<8x128xf32>
    %cst_25 = arith.constant dense<0.000000e+00> : vector<8xf32>
    %43 = vector.multi_reduction <add>, %42, %cst_25 [1] : vector<8x128xf32> to vector<8xf32>
    %44 = vector.shape_cast %43 : vector<8xf32> to vector<8x1xf32>
    %45 = vector.broadcast %44 : vector<8x1xf32> to vector<8x128xf32>
    %46 = arith.divf %42, %45 : vector<8x128xf32>
    %47 = math.exp %27 : vector<8x128xf32>
    %48 = arith.select %35, %47, %27 : vector<8x128xi1>, vector<8x128xf32>
    %49 = arith.select %30, %46, %48 : vector<8x128xi1>, vector<8x128xf32>
    %c0_26 = arith.constant 0 : index
    %c0_27 = arith.constant 0 : index
    %50 = vector.load %arg10[%c0_26, %c0_27] : memref<8x128xf32, #tpu.memory_space<vmem>>, vector<8x128xf32>
    tpu.vector_store %arg10[%c0_26, %c0_27], %49 {strides = array<i32>} : memref<8x128xf32, #tpu.memory_space<vmem>>, vector<8x128xf32>,
    return
  }
  func.func @transform_0(%arg0: i32) -> (i32, i32) {
    %c0_i32 = arith.constant 0 : i32
    %c0_i32_0 = arith.constant 0 : i32
    return %arg0, %c0_i32 : i32, i32
  }
  func.func @transform_1(%arg0: i32) -> (i32, i32) {
    %c0_i32 = arith.constant 0 : i32
    %c0_i32_0 = arith.constant 0 : i32
    %c0_i32_1 = arith.constant 0 : i32
    return %c0_i32, %c0_i32_0 : i32, i32
  }
  func.func @transform_2(%arg0: i32) -> (i32, i32) {
    %c0_i32 = arith.constant 0 : i32
    %c0_i32_0 = arith.constant 0 : i32
    %c0_i32_1 = arith.constant 0 : i32
    return %c0_i32, %c0_i32_0 : i32, i32
  }
  func.func @transform_3(%arg0: i32) -> (i32, i32) {
    %c0_i32 = arith.constant 0 : i32
    %c0_i32_0 = arith.constant 0 : i32
    %c0_i32_1 = arith.constant 0 : i32
    return %c0_i32, %c0_i32_0 : i32, i32
  }
  func.func @transform_4(%arg0: i32) -> (i32, i32) {
    %c0_i32 = arith.constant 0 : i32
    %c0_i32_0 = arith.constant 0 : i32
    %c0_i32_1 = arith.constant 0 : i32
    return %c0_i32, %c0_i32_0 : i32, i32
  }
  func.func @transform_5(%arg0: i32) -> (i32, i32) {
    %c0_i32 = arith.constant 0 : i32
    %c0_i32_0 = arith.constant 0 : i32
    %c0_i32_1 = arith.constant 0 : i32
    return %c0_i32, %c0_i32_0 : i32, i32
  }
  func.func @transform_6(%arg0: i32) -> (i32, i32) {
    %c0_i32 = arith.constant 0 : i32
    %c0_i32_0 = arith.constant 0 : i32
    %c0_i32_1 = arith.constant 0 : i32
    return %c0_i32, %c0_i32_0 : i32, i32
  }
  func.func @transform_7(%arg0: i32) -> (i32, i32) {
    %c0_i32 = arith.constant 0 : i32
    %c0_i32_0 = arith.constant 0 : i32
    %c0_i32_1 = arith.constant 0 : i32
    return %c0_i32, %c0_i32_0 : i32, i32
  }
  func.func @transform_8(%arg0: i32) -> (i32, i32) {
    %c0_i32 = arith.constant 0 : i32
    %c0_i32_0 = arith.constant 0 : i32
    %c0_i32_1 = arith.constant 0 : i32
    return %c0_i32, %c0_i32_0 : i32, i32
  }
  func.func @transform_9(%arg0: i32) -> (i32, i32) {
    %c0_i32 = arith.constant 0 : i32
    %c0_i32_0 = arith.constant 0 : i32
    return %arg0, %c0_i32 : i32, i32
  }
}

</mosaic_0001>

<llo_original>
// kernel: tpu_custom_call.1
$region0: #{tpu_custom_call.1}
  #allocation0 [shape = 'u32[]', space=smem, size = 0x4, offset = 0x4, fixed_abs, tag = 'smem constant byte address 0x4 - core index']
  #allocation1 [shape = 'u32[72,128]{1,0:T(1,128)}', space=vmem, size = 0x9000, scoped, tag = 'internal scratch']
  %s0 = inlined_call_operand.hbm [shape: bf16[8,128], index: 0, kind: input, shape index: {}]
  %s1 = inlined_call_operand.hbm [shape: bf16[128,128], index: 1, kind: input, shape index: {}]
  %s2 = inlined_call_operand.vmem [shape: f32[1,128], index: 2, kind: input, shape index: {}]
  %s3 = inlined_call_operand.hbm [shape: bf16[128,128], index: 3, kind: input, shape index: {}]
  %s4 = inlined_call_operand.vmem [shape: f32[1,128], index: 4, kind: input, shape index: {}]
  %s5 = inlined_call_operand.hbm [shape: bf16[128,128], index: 5, kind: input, shape index: {}]
  %s6 = inlined_call_operand.vmem [shape: f32[1,128], index: 6, kind: input, shape index: {}]
  %s7 = inlined_call_operand.hbm [shape: bf16[128,128], index: 7, kind: input, shape index: {}]
  %s8 = inlined_call_operand.vmem [shape: f32[1,128], index: 8, kind: input, shape index: {}]
  %s9 = inlined_call_operand.hbm [shape: f32[8,128], index: 9, kind: output, shape index: {}]
  %s10 = sld [smem:[#allocation0]]
  $region66: #{tpu_custom_call.1} parent=0
    _
  %s12 = ssub.s32 1, %s10
  %s13 = scalar_select 0, %s12, %s10
  $region1: #{tpu_custom_call.1} parent=0
    #allocation2 [shape = 'u8[2048]{0}', space=vmem, size = 0x800, scoped, tag = 'input window, operand 0, single buffered']
    #allocation3 [shape = 's32[1]{0}', space=sflag, size = 0x4, scoped, tag = 'scoped memory for tpu_custom_call.1']
    #allocation4 [shape = 's32[1]{0}', space=sflag, size = 0x4, scoped, tag = 'scoped memory for tpu_custom_call.1']
    #allocation5 [shape = 'u8[32768]{0}', space=vmem, size = 0x8000, scoped, tag = 'input window, operand 1, single buffered']
    #allocation6 [shape = 's32[1]{0}', space=sflag, size = 0x4, scoped, tag = 'scoped memory for tpu_custom_call.1']
    #allocation7 [shape = 'u8[32768]{0}', space=vmem, size = 0x8000, scoped, tag = 'input window, operand 3, single buffered']
    #allocation8 [shape = 'u8[32768]{0}', space=vmem, size = 0x8000, scoped, tag = 'input window, operand 5, single buffered']
    #allocation9 [shape = 's32[1]{0}', space=sflag, size = 0x4, scoped, tag = 'scoped memory for tpu_custom_call.1']
    #allocation10 [shape = 'u8[32768]{0}', space=vmem, size = 0x8000, scoped, tag = 'input window, operand 7, single buffered']
    #allocation11 [shape = 'u8[4096]{0}', space=vmem, size = 0x1000, scoped, tag = 'output window, operand 0, single buffered']
    %14 = vsyncpa [#allocation3], 0
    %15 = vsyncpa [#allocation6], 0
    %16 = vsyncpa [#allocation9], 0
    %17 = vsyncpa [#allocation4], 0
    // Predicated region
    $region2: #{tpu_custom_call.1} parent=1 // pred_check
      _
    $region3: #{tpu_custom_call.1} parent=1 // pred_check_branch
      %19 = sbr.rel (0) target = $region5
    $region4: #{tpu_custom_call.1} parent=1 // pred_region
      %21 = vsyncadd [#allocation3], 0
      %s23 = sshll.u32 %s0, 4
      %s24 = int_to_ptr.hbm [resolvable:$true] %s23
      %s25 = sshll.u32 [#allocation2], 4
      %s26 = int_to_ptr.vmem [resolvable:$true] %s25
      %28 = dma.hbm_to_vmem [thread:$0]  %s24, 64, %s26, [#allocation3]
    $region5: #{tpu_custom_call.1} parent=1 // pred_fallthru
      _
    // Predicated region
    $region6: #{tpu_custom_call.1} parent=1 // pred_check
      _
    $region7: #{tpu_custom_call.1} parent=1 // pred_check_branch
      %30 = sbr.rel (0) target = $region9
    $region8: #{tpu_custom_call.1} parent=1 // pred_region
      %32 = vsyncadd [#allocation6], 0
      %s33 = sshll.u32 %s1, 4
      %s34 = int_to_ptr.hbm [resolvable:$true] %s33
      %s35 = sshll.u32 [#allocation5], 4
      %s36 = int_to_ptr.vmem [resolvable:$true] %s35
      %41 = dma.hbm_to_vmem [thread:$0]  %s34, 1024, %s36, [#allocation6], 64, 64, 4
    $region9: #{tpu_custom_call.1} parent=1 // pred_fallthru
      _
    // Predicated region
    $region10: #{tpu_custom_call.1} parent=1 // pred_check
      _
    $region11: #{tpu_custom_call.1} parent=1 // pred_check_branch
      %43 = sbr.rel (0) target = $region13
    $region12: #{tpu_custom_call.1} parent=1 // pred_region
      _
    $region13: #{tpu_custom_call.1} parent=1 // pred_fallthru
      _
    // Predicated region
    $region14: #{tpu_custom_call.1} parent=1 // pred_check
      _
    $region15: #{tpu_custom_call.1} parent=1 // pred_check_branch
      %45 = sbr.rel (0) target = $region17
    $region16: #{tpu_custom_call.1} parent=1 // pred_region
      %47 = vsyncadd [#allocation6], 0
      %s48 = sshll.u32 %s3, 4
      %s49 = int_to_ptr.hbm [resolvable:$true] %s48
      %s50 = sshll.u32 [#allocation7], 4
      %s51 = int_to_ptr.vmem [resolvable:$true] %s50
      %56 = dma.hbm_to_vmem [thread:$0]  %s49, 1024, %s51, [#allocation6], 64, 64, 4
    $region17: #{tpu_custom_call.1} parent=1 // pred_fallthru
      _
    // Predicated region
    $region18: #{tpu_custom_call.1} parent=1 // pred_check
      _
    $region19: #{tpu_custom_call.1} parent=1 // pred_check_branch
      %58 = sbr.rel (0) target = $region21
    $region20: #{tpu_custom_call.1} parent=1 // pred_region
      _
    $region21: #{tpu_custom_call.1} parent=1 // pred_fallthru
      _
    // Predicated region
    $region22: #{tpu_custom_call.1} parent=1 // pred_check
      _
    $region23: #{tpu_custom_call.1} parent=1 // pred_check_branch
      %60 = sbr.rel (0) target = $region25
    $region24: #{tpu_custom_call.1} parent=1 // pred_region
      %62 = vsyncadd [#allocation9], 0
      %s63 = sshll.u32 %s5, 4
      %s64 = int_to_ptr.hbm [resolvable:$true] %s63
      %s65 = sshll.u32 [#allocation8], 4
      %s66 = int_to_ptr.vmem [resolvable:$true] %s65
      %71 = dma.hbm_to_vmem [thread:$0]  %s64, 1024, %s66, [#allocation9], 64, 64, 4
    $region25: #{tpu_custom_call.1} parent=1 // pred_fallthru
      _
    // Predicated region
    $region26: #{tpu_custom_call.1} parent=1 // pred_check
      _
    $region27: #{tpu_custom_call.1} parent=1 // pred_check_branch
      %73 = sbr.rel (0) target = $region29
    $region28: #{tpu_custom_call.1} parent=1 // pred_region
      _
    $region29: #{tpu_custom_call.1} parent=1 // pred_fallthru
      _
    // Predicated region
    $region30: #{tpu_custom_call.1} parent=1 // pred_check
      _
    $region31: #{tpu_custom_call.1} parent=1 // pred_check_branch
      %75 = sbr.rel (0) target = $region33
    $region32: #{tpu_custom_call.1} parent=1 // pred_region
      %77 = vsyncadd [#allocation9], 0
      %s78 = sshll.u32 %s7, 4
      %s79 = int_to_ptr.hbm [resolvable:$true] %s78
      %s80 = sshll.u32 [#allocation10], 4
      %s81 = int_to_ptr.vmem [resolvable:$true] %s80
      %86 = dma.hbm_to_vmem [thread:$0]  %s79, 1024, %s81, [#allocation9], 64, 64, 4
    $region33: #{tpu_custom_call.1} parent=1 // pred_fallthru
      _
    // Predicated region
    $region34: #{tpu_custom_call.1} parent=1 // pred_check
      _
    $region35: #{tpu_custom_call.1} parent=1 // pred_check_branch
      %88 = sbr.rel (0) target = $region37
    $region36: #{tpu_custom_call.1} parent=1 // pred_region
      _
    $region37: #{tpu_custom_call.1} parent=1 // pred_fallthru
      _
    // Predicated region
    $region38: #{tpu_custom_call.1} parent=1 // pred_check
      _
    $region39: #{tpu_custom_call.1} parent=1 // pred_check_branch
      %90 = sbr.rel (0) target = $region41
    $region40: #{tpu_custom_call.1} parent=1 // pred_region
      %92 = dma.done [#allocation3], 64
    $region41: #{tpu_custom_call.1} parent=1 // pred_fallthru
      _
    // Predicated region
    $region42: #{tpu_custom_call.1} parent=1 // pred_check
      _
    $region43: #{tpu_custom_call.1} parent=1 // pred_check_branch
      %94 = sbr.rel (0) target = $region45
    $region44: #{tpu_custom_call.1} parent=1 // pred_region
      %96 = dma.done [#allocation6], 1024
    $region45: #{tpu_custom_call.1} parent=1 // pred_fallthru
      _
    // Predicated region
    $region46: #{tpu_custom_call.1} parent=1 // pred_check
      _
    $region47: #{tpu_custom_call.1} parent=1 // pred_check_branch
      %98 = sbr.rel (0) target = $region49
    $region48: #{tpu_custom_call.1} parent=1 // pred_region
      %100 = dma.done [#allocation6], 1024
    $region49: #{tpu_custom_call.1} parent=1 // pred_fallthru
      _
    // Predicated region
    $region50: #{tpu_custom_call.1} parent=1 // pred_check
      _
    $region51: #{tpu_custom_call.1} parent=1 // pred_check_branch
      %102 = sbr.rel (0) target = $region53
    $region52: #{tpu_custom_call.1} parent=1 // pred_region
      %104 = dma.done [#allocation9], 1024
    $region53: #{tpu_custom_call.1} parent=1 // pred_fallthru
      _
    // Predicated region
    $region54: #{tpu_custom_call.1} parent=1 // pred_check
      _
    $region55: #{tpu_custom_call.1} parent=1 // pred_check_branch
      %106 = sbr.rel (0) target = $region57
    $region56: #{tpu_custom_call.1} parent=1 // pred_region
      %108 = dma.done [#allocation9], 1024
    $region57: #{tpu_custom_call.1} parent=1 // pred_fallthru
      _
    %v109 = vld [vmem:[#allocation2] sm:$0xf]
    %v110 = vld [vmem:[#allocation5] sm:$0xf]
    %v111 = vld [vmem:[#allocation5 + $0x4] sm:$0xf]
    %v112 = vld [vmem:[#allocation5 + $0x8] sm:$0xf]
    %v113 = vld [vmem:[#allocation5 + $0xc] sm:$0xf]
    %v114 = vld [vmem:[#allocation5 + $0x10] sm:$0xf]
    %v115 = vld [vmem:[#allocation5 + $0x14] sm:$0xf]
    %v116 = vld [vmem:[#allocation5 + $0x18] sm:$0xf]
    %v117 = vld [vmem:[#allocation5 + $0x1c] sm:$0xf]
    %v118 = vld [vmem:[#allocation5 + $0x20] sm:$0xf]
    %v119 = vld [vmem:[#allocation5 + $0x24] sm:$0xf]
    %v120 = vld [vmem:[#allocation5 + $0x28] sm:$0xf]
    %v121 = vld [vmem:[#allocation5 + $0x2c] sm:$0xf]
    %v122 = vld [vmem:[#allocation5 + $0x30] sm:$0xf]
    %v123 = vld [vmem:[#allocation5 + $0x34] sm:$0xf]
    %v124 = vld [vmem:[#allocation5 + $0x38] sm:$0xf]
    %v125 = vld [vmem:[#allocation5 + $0x3c] sm:$0xf]
    %v126 = vld [vmem:[%s2] sm:$0x1]
    %v128 = vperm.slane %v126, 0
    %v146 = vunpack.c.l.b16 %v110
    %v147 = vunpack.c.l.b16 %v111
    %v148 = vunpack.c.l.b16 %v112
    %v149 = vunpack.c.l.b16 %v113
    %v150 = vunpack.c.l.b16 %v114
    %v151 = vunpack.c.l.b16 %v115
    %v152 = vunpack.c.l.b16 %v116
    %v153 = vunpack.c.l.b16 %v117
    %v154 = vunpack.c.l.b16 %v118
    %v155 = vunpack.c.l.b16 %v119
    %v156 = vunpack.c.l.b16 %v120
    %v157 = vunpack.c.l.b16 %v121
    %v158 = vunpack.c.l.b16 %v122
    %v159 = vunpack.c.l.b16 %v123
    %v160 = vunpack.c.l.b16 %v124
    %v161 = vunpack.c.l.b16 %v125
    %v162 = vpack.c.b16 %v147, %v146
    %v163 = vpack.c.b16 %v149, %v148
    %v164 = vpack.c.b16 %v151, %v150
    %v165 = vpack.c.b16 %v153, %v152
    %v166 = vpack.c.b16 %v155, %v154
    %v167 = vpack.c.b16 %v157, %v156
    %v168 = vpack.c.b16 %v159, %v158
    %v169 = vpack.c.b16 %v161, %v160
    %178 = vmatpush.bf16.msra.mxu0 %v169
    %179 = vmatpush.bf16.msra.mxu0 %v168
    %180 = vmatpush.bf16.msra.mxu0 %v167
    %181 = vmatpush.bf16.msra.mxu0 %v166
    %182 = vmatpush.bf16.msra.mxu0 %v165
    %183 = vmatpush.bf16.msra.mxu0 %v164
    %184 = vmatpush.bf16.msra.mxu0 %v163
    %185 = vmatpush.bf16.msra.mxu0 %v162
    %186 = vmatmul.bf16.gmra.mxu0 %v109
    %v187 = vpop.f32.mrf.mxu0
    %v188 = vadd.f32 %v128, %v187
    %v189 = vpop.f32.mrf.mxu0
    %190 = vdwg.mxu0
    %v191 = vmax.f32 %v188, 0.0
    %v192 = vpack.c.bf16 %v191, %v191
    %v193 = vld [vmem:[#allocation7] sm:$0xf]
    %v194 = vld [vmem:[#allocation7 + $0x4] sm:$0xf]
    %v195 = vld [vmem:[#allocation7 + $0x8] sm:$0xf]
    %v196 = vld [vmem:[#allocation7 + $0xc] sm:$0xf]
    %v197 = vld [vmem:[#allocation7 + $0x10] sm:$0xf]
    %v198 = vld [vmem:[#allocation7 + $0x14] sm:$0xf]
    %v199 = vld [vmem:[#allocation7 + $0x18] sm:$0xf]
    %v200 = vld [vmem:[#allocation7 + $0x1c] sm:$0xf]
    %v201 = vld [vmem:[#allocation7 + $0x20] sm:$0xf]
    %v202 = vld [vmem:[#allocation7 + $0x24] sm:$0xf]
    %v203 = vld [vmem:[#allocation7 + $0x28] sm:$0xf]
    %v204 = vld [vmem:[#allocation7 + $0x2c] sm:$0xf]
    %v205 = vld [vmem:[#allocation7 + $0x30] sm:$0xf]
    %v206 = vld [vmem:[#allocation7 + $0x34] sm:$0xf]
    %v207 = vld [vmem:[#allocation7 + $0x38] sm:$0xf]
    %v208 = vld [vmem:[#allocation7 + $0x3c] sm:$0xf]
    %v209 = vld [vmem:[%s4] sm:$0x1]
    %v211 = vperm.slane %v209, 0
    %v229 = vunpack.c.l.b16 %v193
    %v230 = vunpack.c.l.b16 %v194
    %v231 = vunpack.c.l.b16 %v195
    %v232 = vunpack.c.l.b16 %v196
    %v233 = vunpack.c.l.b16 %v197
    %v234 = vunpack.c.l.b16 %v198
    %v235 = vunpack.c.l.b16 %v199
    %v236 = vunpack.c.l.b16 %v200
    %v237 = vunpack.c.l.b16 %v201
    %v238 = vunpack.c.l.b16 %v202
    %v239 = vunpack.c.l.b16 %v203
    %v240 = vunpack.c.l.b16 %v204
    %v241 = vunpack.c.l.b16 %v205
    %v242 = vunpack.c.l.b16 %v206
    %v243 = vunpack.c.l.b16 %v207
    %v244 = vunpack.c.l.b16 %v208
    %v245 = vpack.c.b16 %v230, %v229
    %v246 = vpack.c.b16 %v232, %v231
    %v247 = vpack.c.b16 %v234, %v233
    %v248 = vpack.c.b16 %v236, %v235
    %v249 = vpack.c.b16 %v238, %v237
    %v250 = vpack.c.b16 %v240, %v239
    %v251 = vpack.c.b16 %v242, %v241
    %v252 = vpack.c.b16 %v244, %v243
    %261 = vmatpush.bf16.msra.mxu0 %v252
    %262 = vmatpush.bf16.msra.mxu0 %v251
    %263 = vmatpush.bf16.msra.mxu0 %v250
    %264 = vmatpush.bf16.msra.mxu0 %v249
    %265 = vmatpush.bf16.msra.mxu0 %v248
    %266 = vmatpush.bf16.msra.mxu0 %v247
    %267 = vmatpush.bf16.msra.mxu0 %v246
    %268 = vmatpush.bf16.msra.mxu0 %v245
    %269 = vmatmul.bf16.gmra.mxu0 %v192
    %v270 = vpop.f32.mrf.mxu0
    %v271 = vadd.f32 %v211, %v270
    %v272 = vpop.f32.mrf.mxu0
    %273 = vdwg.mxu0
    %v274 = vmax.f32 %v271, 0.0
    %v275 = vpack.c.bf16 %v274, %v274
    %v276 = vld [vmem:[#allocation8] sm:$0xf]
    %v277 = vld [vmem:[#allocation8 + $0x4] sm:$0xf]
    %v278 = vld [vmem:[#allocation8 + $0x8] sm:$0xf]
    %v279 = vld [vmem:[#allocation8 + $0xc] sm:$0xf]
    %v280 = vld [vmem:[#allocation8 + $0x10] sm:$0xf]
    %v281 = vld [vmem:[#allocation8 + $0x14] sm:$0xf]
    %v282 = vld [vmem:[#allocation8 + $0x18] sm:$0xf]
    %v283 = vld [vmem:[#allocation8 + $0x1c] sm:$0xf]
    %v284 = vld [vmem:[#allocation8 + $0x20] sm:$0xf]
    %v285 = vld [vmem:[#allocation8 + $0x24] sm:$0xf]
    %v286 = vld [vmem:[#allocation8 + $0x28] sm:$0xf]
    %v287 = vld [vmem:[#allocation8 + $0x2c] sm:$0xf]
    %v288 = vld [vmem:[#allocation8 + $0x30] sm:$0xf]
    %v289 = vld [vmem:[#allocation8 + $0x34] sm:$0xf]
    %v290 = vld [vmem:[#allocation8 + $0x38] sm:$0xf]
    %v291 = vld [vmem:[#allocation8 + $0x3c] sm:$0xf]
    %v292 = vld [vmem:[%s6] sm:$0x1]
    %v294 = vperm.slane %v292, 0
    %v312 = vunpack.c.l.b16 %v276
    %v313 = vunpack.c.l.b16 %v277
    %v314 = vunpack.c.l.b16 %v278
    %v315 = vunpack.c.l.b16 %v279
    %v316 = vunpack.c.l.b16 %v280
    %v317 = vunpack.c.l.b16 %v281
    %v318 = vunpack.c.l.b16 %v282
    %v319 = vunpack.c.l.b16 %v283
    %v320 = vunpack.c.l.b16 %v284
    %v321 = vunpack.c.l.b16 %v285
    %v322 = vunpack.c.l.b16 %v286
    %v323 = vunpack.c.l.b16 %v287
    %v324 = vunpack.c.l.b16 %v288
    %v325 = vunpack.c.l.b16 %v289
    %v326 = vunpack.c.l.b16 %v290
    %v327 = vunpack.c.l.b16 %v291
    %v328 = vpack.c.b16 %v313, %v312
    %v329 = vpack.c.b16 %v315, %v314
    %v330 = vpack.c.b16 %v317, %v316
    %v331 = vpack.c.b16 %v319, %v318
    %v332 = vpack.c.b16 %v321, %v320
    %v333 = vpack.c.b16 %v323, %v322
    %v334 = vpack.c.b16 %v325, %v324
    %v335 = vpack.c.b16 %v327, %v326
    %344 = vmatpush.bf16.msra.mxu0 %v335
    %345 = vmatpush.bf16.msra.mxu0 %v334
    %346 = vmatpush.bf16.msra.mxu0 %v333
    %347 = vmatpush.bf16.msra.mxu0 %v332
    %348 = vmatpush.bf16.msra.mxu0 %v331
    %349 = vmatpush.bf16.msra.mxu0 %v330
    %350 = vmatpush.bf16.msra.mxu0 %v329
    %351 = vmatpush.bf16.msra.mxu0 %v328
    %352 = vmatmul.bf16.gmra.mxu0 %v275
    %v353 = vpop.f32.mrf.mxu0
    %v354 = vadd.f32 %v294, %v353
    %v355 = vpop.f32.mrf.mxu0
    %356 = vdwg.mxu0
    %v357 = vpack.c.bf16 %v354, %v354
    %v358 = vld [vmem:[#allocation10] sm:$0xf]
    %v359 = vld [vmem:[#allocation10 + $0x4] sm:$0xf]
    %v360 = vld [vmem:[#allocation10 + $0x8] sm:$0xf]
    %v361 = vld [vmem:[#allocation10 + $0xc] sm:$0xf]
    %v362 = vld [vmem:[#allocation10 + $0x10] sm:$0xf]
    %v363 = vld [vmem:[#allocation10 + $0x14] sm:$0xf]
    %v364 = vld [vmem:[#allocation10 + $0x18] sm:$0xf]
    %v365 = vld [vmem:[#allocation10 + $0x1c] sm:$0xf]
    %v366 = vld [vmem:[#allocation10 + $0x20] sm:$0xf]
    %v367 = vld [vmem:[#allocation10 + $0x24] sm:$0xf]
    %v368 = vld [vmem:[#allocation10 + $0x28] sm:$0xf]
    %v369 = vld [vmem:[#allocation10 + $0x2c] sm:$0xf]
    %v370 = vld [vmem:[#allocation10 + $0x30] sm:$0xf]
    %v371 = vld [vmem:[#allocation10 + $0x34] sm:$0xf]
    %v372 = vld [vmem:[#allocation10 + $0x38] sm:$0xf]
    %v373 = vld [vmem:[#allocation10 + $0x3c] sm:$0xf]
    %v374 = vld [vmem:[%s8] sm:$0x1]
    %v376 = vperm.slane %v374, 0
    %v394 = vunpack.c.l.b16 %v358
    %v395 = vunpack.c.l.b16 %v359
    %v396 = vunpack.c.l.b16 %v360
    %v397 = vunpack.c.l.b16 %v361
    %v398 = vunpack.c.l.b16 %v362
    %v399 = vunpack.c.l.b16 %v363
    %v400 = vunpack.c.l.b16 %v364
    %v401 = vunpack.c.l.b16 %v365
    %v402 = vunpack.c.l.b16 %v366
    %v403 = vunpack.c.l.b16 %v367
    %v404 = vunpack.c.l.b16 %v368
    %v405 = vunpack.c.l.b16 %v369
    %v406 = vunpack.c.l.b16 %v370
    %v407 = vunpack.c.l.b16 %v371
    %v408 = vunpack.c.l.b16 %v372
    %v409 = vunpack.c.l.b16 %v373
    %v410 = vpack.c.b16 %v395, %v394
    %v411 = vpack.c.b16 %v397, %v396
    %v412 = vpack.c.b16 %v399, %v398
    %v413 = vpack.c.b16 %v401, %v400
    %v414 = vpack.c.b16 %v403, %v402
    %v415 = vpack.c.b16 %v405, %v404
    %v416 = vpack.c.b16 %v407, %v406
    %v417 = vpack.c.b16 %v409, %v408
    %426 = vmatpush.bf16.msra.mxu0 %v417
    %427 = vmatpush.bf16.msra.mxu0 %v416
    %428 = vmatpush.bf16.msra.mxu0 %v415
    %429 = vmatpush.bf16.msra.mxu0 %v414
    %430 = vmatpush.bf16.msra.mxu0 %v413
    %431 = vmatpush.bf16.msra.mxu0 %v412
    %432 = vmatpush.bf16.msra.mxu0 %v411
    %433 = vmatpush.bf16.msra.mxu0 %v410
    %434 = vmatmul.bf16.gmra.mxu0 %v357
    %v435 = vpop.f32.mrf.mxu0
    %v436 = vadd.f32 %v376, %v435
    %v437 = vpop.f32.mrf.mxu0
    %438 = vdwg.mxu0
    %v439 = vlaneseq
    %v440 = vand.u32 %v439, 127
    %vm441 = vcmp.lt.s32.totalorder %v440, 2
    %vm442 = vcmp.ge.s32.totalorder %v440, 2
    %vm443 = vcmp.lt.s32.totalorder %v440, 18
    %vm444 = vmand %vm442, %vm443
    %v445 = vsel %vm441, %v436, -inf
    %446 = vmax.xlane.f32.xlu0 %v445
    %v447 = vpop.xlane.xlu0 %446
    %v448 = vsub.f32 %v445, %v447
    %v449 = vmul.f32 %v448, 1.442695
    %v450 = vpow.pop %v449
    %451 = vadd.xlane.f32.xlu0 %v450
    %v452 = vpop.xlane.xlu0 %451
    %v453 = vrcp.pop %v452
    %v454 = vmul.f32 %v452, %v453
    %v455 = vsub.f32 1.0, %v454
    %v456 = vmul.f32 %v453, %v455
    %v457 = vadd.f32 %v453, %v456
    %vm458 = vweird.f32 %v452
    %vm459 = vweird.f32 %v453
    %vm460 = vmor %vm458, %vm459
    %v461 = vsel %vm460, %v453, %v457
    %v462 = vand.u32 2147483647, %v452
    %vm463 = vcmp.eq.f32.partialorder %v462, 8.507059e+37
    %v464 = vand.u32 %v452, 2147483648
    %v465 = vor.u32 1.1754944e-38, %v464
    %v466 = vsel %vm463, %v465, %v461
    %v467 = vmul.f32 %v450, %v466
    %v468 = vmul.f32 %v436, 1.442695
    %v469 = vpow.pop %v468
    %v470 = vsel %vm444, %v469, %v436
    %v471 = vsel %vm441, %v467, %v470
    %472 = vst [vmem:[#allocation11] sm:$0xff] %v471
    // Predicated region
    $region58: #{tpu_custom_call.1} parent=1 // pred_check
      _
    $region59: #{tpu_custom_call.1} parent=1 // pred_check_branch
      %474 = sbr.rel (0) target = $region61
    $region60: #{tpu_custom_call.1} parent=1 // pred_region
      %476 = vsyncadd [#allocation4], 0
      %s478 = sshll.u32 [#allocation11], 4
      %s479 = int_to_ptr.vmem [resolvable:$true] %s478
      %s480 = sshll.u32 %s9, 4
      %s481 = int_to_ptr.hbm [resolvable:$true] %s480
      %483 = dma.vmem_to_hbm [thread:$0]  %s479, 128, %s481, [#allocation4]
    $region61: #{tpu_custom_call.1} parent=1 // pred_fallthru
      _
    // Predicated region
    $region62: #{tpu_custom_call.1} parent=1 // pred_check
      _
    $region63: #{tpu_custom_call.1} parent=1 // pred_check_branch
      %485 = sbr.rel (0) target = $region65
    $region64: #{tpu_custom_call.1} parent=1 // pred_region
      %487 = dma.done [#allocation4], 128
    $region65: #{tpu_custom_call.1} parent=1 // pred_fallthru
      _
    %488 = vsyncpa [#allocation3], 1
    %489 = vsyncpa [#allocation6], 1
    %490 = vsyncpa [#allocation9], 1
    %491 = vsyncpa [#allocation4], 1

</llo_original>
